<compile_context>
chip_gen: v7x
topology: tpu7x:2x2x1
jax: 0.10.0
libtpu: 0.0.40
codegen_flags: <defaults>
</compile_context>

<pallas_src>
import jax
import jax.numpy as jnp
import numpy as np
from jax.experimental import pallas as pl
from jax.experimental.pallas import tpu as pltpu

# ----------------------------- model config --------------------------------
VOCAB_SIZE = 32
N_EMBED = 16
N_HIDDEN = (32, 24)          # kernel specialised for len(n_hidden) == 2
N_LATENT = 8
PROJ_HIDDEN = max((N_EMBED + VOCAB_SIZE) // 2, 2 * N_EMBED)   # = 32
BATCH = 8

LANES = 128
N_W = 6           # packed 128x128 weight tiles (was 12)
N_B = 8           # bias slab rows (sublane aligned; rows 0..5 used)

# lane offsets inside the packed (., 128) activation / output slab
X_OFF = 0         # x       lanes [  0, 16)
XHAT_OFF = 16     # x_hat   lanes [ 16, 32)
LOGITS_OFF = 32   # logits  lanes [ 32, 64)
PROBS_OFF = 64    # probs   lanes [ 64, 96)
MU_OFF = 96       # mu      lanes [ 96,104)
LOGVAR_OFF = 104  # logvar  lanes [104,112)
H1_OFF = 32       # intermediate: encoder hidden-1 lanes inside a0 (not an output)
PROJ_OFF = 32     # intermediate: projector hidden lanes inside a3 (not an output)


def _cdiv(a, b):
    return -(-a // b)


def _round_up(a, b):
    return _cdiv(a, b) * b


# ------------------------------- kernel ------------------------------------
def _vae_kernel(nf_ref, idx_ref, w_ref, b_ref, p_ref, eps_ref, out_ref):
    t = idx_ref.shape[0]
    nf = nf_ref[0, 0]
    lane = jax.lax.broadcasted_iota(jnp.int32, (t, LANES), 1)

    def lin(x, i):
        # (t,128) @ (128,128) + (1,128): whole-vreg MXU matmul, lane-dense add.
        return jnp.dot(x, w_ref[i], preferred_element_type=jnp.float32) + b_ref[i:i + 1, :]

    # --- M0: embedding lookup (one-hot matmul) fused with encoder layer 1 ---
    ids = idx_ref[...]                                    # (t,1) int32
    onehot = (lane == ids).astype(jnp.float32)            # (t,128)
    a0 = lin(onehot, 0)          # x at [0:16), x@ew0 + eb0 at [32:64)
    h1 = jnp.maximum(a0, 0.0)    # ReLU; x lanes don't feed T1 (zero weight rows)

    # --- encoder layers 2 and 3 ---------------------------------------------
    h2 = jnp.maximum(lin(h1, 1), 0.0)                     # lanes [0:24)
    stats = lin(h2, 2)           # mu at [96:104), logvar at [104:112), 0 elsewhere

    # --- reparameterization: z = mu + (eps*nf)*exp(0.5*logvar) ---------------
    lv_mask = (lane >= LOGVAR_OFF) & (lane < LOGVAR_OFF + N_LATENT)
    std = jnp.exp(0.5 * jnp.where(lv_mask, stats, 0.0))   # exp(0)=1 off-lane, no inf risk
    # tiny (t,8)x(8,128) MXU matmul drops eps onto the logvar lanes (aligned with std)
    eps128 = jnp.dot(eps_ref[...], p_ref[...], preferred_element_type=jnp.float32)
    noise = (eps128 * nf) * std                           # nonzero only on [104:112)
    # z is never materialized: tile 3 carries [dw0|pw0] at BOTH the mu rows and
    # the noise rows, so zin @ T3 == (mu + noise) @ [dw0|pw0] == z @ [dw0|pw0].
    zin = jnp.where(lv_mask, noise, stats)

    # --- decoder layer 1 + projector layer 1 (one tile, disjoint cols) -------
    a3 = lin(zin, 3)             # dec hidden at [0:24), proj hidden at [32:64)
    dec_mask = lane < PROJ_OFF
    h3 = jnp.where(dec_mask, jnp.maximum(a3, 0.0), a3)    # ReLU decoder lanes only

    # --- decoder layer 2 + projector layer 2 (logits at [32:64) and [64:96)) -
    a4 = lin(h3, 4)
    h4 = jnp.where(dec_mask, jnp.maximum(a4, 0.0), a4)

    # --- decoder layer 3 -> x_hat (ReLU after the last layer, as in ref) -----
    xhat = jnp.maximum(lin(h4, 5), 0.0)                   # lanes [16:32)

    # --- masked softmax over the logits copy at lanes [64:96) ----------------
    probs_mask = (lane >= PROBS_OFF) & (lane < PROBS_OFF + VOCAB_SIZE)
    neg = jnp.where(probs_mask, a4, -jnp.inf)
    m = jnp.max(neg, axis=-1, keepdims=True)
    e = jnp.where(probs_mask, jnp.exp(a4 - m), 0.0)
    s = jnp.sum(e, axis=-1, keepdims=True)
    probs = e * pl.reciprocal(s, approx=False)            # EUP reciprocal, not VPU divide

    # disjoint, zero-padded lane ranges -> packing is a pure vreg sum/select
    logits_mask = (lane >= LOGITS_OFF) & (lane < LOGITS_OFF + VOCAB_SIZE)
    out_ref[...] = (jnp.where(lane < X_OFF + N_EMBED, a0, 0.0)    # x
                    + xhat                                         # x_hat
                    + jnp.where(logits_mask, a4, 0.0)              # logits
                    + probs                                        # probs
                    + stats)                                       # mu | logvar


# --------------------------- parameter packing ------------------------------
def pack_params(params):
    """Pack all weights/biases into one 6-tile weight slab, one bias slab and
    one (8,128) eps-placement matrix."""
    W = np.zeros((N_W, LANES, LANES), np.float32)
    B = np.zeros((N_B, LANES), np.float32)
    P = np.zeros((N_LATENT, LANES), np.float32)

    def put_w(i, w, row_off, col_off):
        w = np.asarray(w, np.float32)
        W[i, row_off:row_off + w.shape[0], col_off:col_off + w.shape[1]] = w

    def put_b(i, b, col_off):
        b = np.asarray(b, np.float32).reshape(-1)
        B[i, col_off:col_off + b.shape[0]] = b

    embed = np.asarray(params["embed"], np.float32)
    ew0 = np.asarray(params["ew0"], np.float32)
    eb0 = np.asarray(params["eb0"], np.float32).reshape(-1)
    ew2 = np.asarray(params["ew2"], np.float32)
    eb2 = np.asarray(params["eb2"], np.float32).reshape(-1)

    # T0: one-hot -> [x | pre-bias encoder hidden 1] (embed @ ew0 precomposed host-side)
    put_w(0, embed, 0, X_OFF)
    put_w(0, embed @ ew0, 0, H1_OFF)
    put_b(0, eb0, H1_OFF)

    # T1: encoder layer 2
    put_w(1, params["ew1"], H1_OFF, 0)
    put_b(1, params["eb1"], 0)

    # T2: encoder layer 3 -> mu | logvar in one tile
    put_w(2, ew2[:, :N_LATENT], 0, MU_OFF)
    put_b(2, eb2[:N_LATENT], MU_OFF)
    put_w(2, ew2[:, N_LATENT:], 0, LOGVAR_OFF)
    put_b(2, eb2[N_LATENT:], LOGVAR_OFF)

    # T3: decoder layer 1 + projector layer 1.  Rows duplicated at the mu lanes
    # AND the noise lanes so z = mu + noise never needs to be materialized.
    for row_off in (MU_OFF, LOGVAR_OFF):
        put_w(3, params["dw0"], row_off, 0)
        put_w(3, params["pw0"], row_off, PROJ_OFF)
    put_b(3, params["db0"], 0)
    put_b(3, params["pb0"], PROJ_OFF)

    # T4: decoder layer 2 + projector layer 2 (pw1 duplicated for the softmax copy)
    put_w(4, params["dw1"], 0, 0)
    put_b(4, params["db1"], 0)
    put_w(4, params["pw1"], PROJ_OFF, LOGITS_OFF)
    put_b(4, params["pb1"], LOGITS_OFF)
    put_w(4, params["pw1"], PROJ_OFF, PROBS_OFF)
    put_b(4, params["pb1"], PROBS_OFF)

    # T5: decoder layer 3 -> x_hat
    put_w(5, params["dw2"], 0, XHAT_OFF)
    put_b(5, params["db2"], XHAT_OFF)

    # eps placement: identity mapping onto the logvar lanes (aligned with std)
    P[np.arange(N_LATENT), LOGVAR_OFF + np.arange(N_LATENT)] = 1.0

    return jnp.asarray(W), jnp.asarray(B), jnp.asarray(P)


# ------------------------------ wrapper -------------------------------------
def _choose_tiling(n):
    """Batch tile up to 1024 rows; keep >= 2 grid steps when possible so v7x's
    two TensorCores both get work."""
    n8 = _round_up(max(int(n), 1), 8)
    if n8 <= 8:
        return 8, 8
    grid = max(2, _cdiv(n8, 1024))
    tile = _round_up(_cdiv(n8, grid), 8)
    return tile, tile * grid


def triplet_symmetric_vae_forward(params, idx, eps, noise_factor: float = 1.0):
    """Full VAE forward in one Pallas kernel.

    idx: (N,) int token indices, eps: (N, N_LATENT) f32 gaussian noise.
    Returns (x, x_hat, logits, probs, mu, logvar) like the PyTorch module.
    """
    # TODO(synk): torch.randn_like has no bit-identical in-kernel equivalent, so
    # eps is an explicit input (pltpu.prng_* would change RNG semantics).
    n = int(idx.shape[0])
    tile, n_pad = _choose_tiling(n)
    grid = (n_pad // tile,)

    idx2d = jnp.zeros((n_pad, 1), jnp.int32).at[:n, 0].set(idx.astype(jnp.int32))
    eps_in = jnp.zeros((n_pad, N_LATENT), jnp.float32).at[:n].set(eps.astype(jnp.float32))
    nf = jnp.full((1, 1), noise_factor, jnp.float32)
    w_slab, b_slab, p_slab = pack_params(params)

    out = pl.pallas_call(
        _vae_kernel,
        out_shape=jax.ShapeDtypeStruct((n_pad, LANES), jnp.float32),
        grid=grid,
        in_specs=[
            pl.BlockSpec(memory_space=pltpu.MemorySpace.SMEM),           # noise_factor
            pl.BlockSpec((tile, 1), lambda i: (i, 0)),                   # idx
            pl.BlockSpec((N_W, LANES, LANES), lambda i: (0, 0, 0)),      # weights (resident)
            pl.BlockSpec((N_B, LANES), lambda i: (0, 0)),                # biases  (resident)
            pl.BlockSpec((N_LATENT, LANES), lambda i: (0, 0)),           # eps placement (resident)
            pl.BlockSpec((tile, N_LATENT), lambda i: (i, 0)),            # eps (narrow, full lane dim)
        ],
        out_specs=pl.BlockSpec((tile, LANES), lambda i: (i, 0)),
        compiler_params=pltpu.CompilerParams(
            dimension_semantics=("parallel",)),
    )(nf, idx2d, w_slab, b_slab, p_slab, eps_in)

    # NOTE: if the consumer can take the packed (N,128) slab, skip these slices
    # (they roughly double end-to-end HBM traffic for very large N).
    x = out[:n, X_OFF:X_OFF + N_EMBED]
    xhat = out[:n, XHAT_OFF:XHAT_OFF + N_EMBED]
    logits = out[:n, LOGITS_OFF:LOGITS_OFF + VOCAB_SIZE]
    probs = out[:n, PROBS_OFF:PROBS_OFF + VOCAB_SIZE]
    mu = out[:n, MU_OFF:MU_OFF + N_LATENT]
    logvar = out[:n, LOGVAR_OFF:LOGVAR_OFF + N_LATENT]
    return x, xhat, logits, probs, mu, logvar


# ---------------------------- parameter init --------------------------------
def init_params(key):
    """Deterministic kaiming-uniform weights (zero bias), normal embedding."""
    keys = jax.random.split(key, 16)
    ki = iter(keys)

    def kaiming(k, fan_in, fan_out):
        bound = float(np.sqrt(6.0 / fan_in))
        return jax.random.uniform(k, (fan_in, fan_out), jnp.float32, -bound, bound)

    def zeros_bias(fan_out):
        return jnp.zeros((1, fan_out), jnp.float32)

    p = {}
    p["embed"] = jax.random.normal(next(ki), (VOCAB_SIZE, N_EMBED), jnp.float32)

    enc_dims = [N_EMBED] + list(N_HIDDEN) + [2 * N_LATENT]
    for i in range(3):
        p[f"ew{i}"] = kaiming(next(ki), enc_dims[i], enc_dims[i + 1])
        p[f"eb{i}"] = zeros_bias(enc_dims[i + 1])

    dec_dims = [N_LATENT] + list(N_HIDDEN)[::-1] + [N_EMBED]
    for i in range(3):
        p[f"dw{i}"] = kaiming(next(ki), dec_dims[i], dec_dims[i + 1])
        p[f"db{i}"] = zeros_bias(dec_dims[i + 1])

    proj_dims = [N_LATENT, PROJ_HIDDEN, VOCAB_SIZE]
    for i in range(2):
        p[f"pw{i}"] = kaiming(next(ki), proj_dims[i], proj_dims[i + 1])
        p[f"pb{i}"] = zeros_bias(proj_dims[i + 1])

    return p


# ------------------------- pure-JAX reference -------------------------------
def _reference(params, idx, eps, noise_factor=1.0):
    x = params["embed"][idx]
    h = jnp.maximum(x @ params["ew0"] + params["eb0"], 0.0)
    h = jnp.maximum(h @ params["ew1"] + params["eb1"], 0.0)
    stats = h @ params["ew2"] + params["eb2"]
    mu, logvar = stats[:, :N_LATENT], stats[:, N_LATENT:]
    z = mu + (eps * noise_factor) * jnp.exp(0.5 * logvar)
    d = jnp.maximum(z @ params["dw0"] + params["db0"], 0.0)
    d = jnp.maximum(d @ params["dw1"] + params["db1"], 0.0)
    d = jnp.maximum(d @ params["dw2"] + params["db2"], 0.0)
    p = z @ params["pw0"] + params["pb0"]
    logits = p @ params["pw1"] + params["pb1"]
    probs = jax.nn.softmax(logits, axis=-1)
    return x, d, logits, probs, mu, logvar


# --------------------------------- main --------------------------------------
if __name__ == "__main__":
    key = jax.random.PRNGKey(0)
    k_param, k_idx, k_eps = jax.random.split(key, 3)

    params = init_params(k_param)
    idx = jax.random.randint(k_idx, (BATCH,), 0, VOCAB_SIZE, dtype=jnp.int32)
    eps = jax.random.normal(k_eps, (BATCH, N_LATENT), jnp.float32)

    outs = triplet_symmetric_vae_forward(params, idx, eps, noise_factor=1.0)
    outs = jax.block_until_ready(outs)

    refs = _reference(params, idx, eps, noise_factor=1.0)
    for got, want in zip(outs, refs):
        np.testing.assert_allclose(np.asarray(got), np.asarray(want),
                                   rtol=1e-5, atol=1e-5)

    print("KERNEL_OK")
</pallas_src>

<mosaic_0001>
module attributes {stable_mosaic.version = 11 : i64} {
  func.func @_vae_kernel(%arg0: i32, %arg1: memref<1x1xf32, #tpu.memory_space<smem>>, %arg2: memref<8x1xi32, #tpu.memory_space<vmem>>, %arg3: memref<6x128x128xf32, #tpu.memory_space<vmem>>, %arg4: memref<8x128xf32, #tpu.memory_space<vmem>>, %arg5: memref<8x128xf32, #tpu.memory_space<vmem>>, %arg6: memref<8x8xf32, #tpu.memory_space<vmem>>, %arg7: memref<8x128xf32, #tpu.memory_space<vmem>>) attributes {dimension_semantics = [#tpu.dimension_semantics<parallel>], iteration_bounds = array<i64: 1>, scalar_prefetch = 0 : i64, scratch_operands = 0 : i64, tpu.core_type = #tpu.core_type<tc>, window_params = [{transform_indices = @transform_0, window_bounds = array<i64: 1, 1>}, {transform_indices = @transform_1, window_bounds = array<i64: 8, 1>}, {pipeline_mode = #tpu.pipeline_mode<synchronous>, transform_indices = @transform_2, window_bounds = array<i64: 6, 128, 128>}, {pipeline_mode = #tpu.pipeline_mode<synchronous>, transform_indices = @transform_3, window_bounds = array<i64: 8, 128>}, {pipeline_mode = #tpu.pipeline_mode<synchronous>, transform_indices = @transform_4, window_bounds = array<i64: 8, 128>}, {transform_indices = @transform_5, window_bounds = array<i64: 8, 8>}, {transform_indices = @transform_6, window_bounds = array<i64: 8, 128>}]} {
    %c0 = arith.constant 0 : index
    %c0_0 = arith.constant 0 : index
    %0 = memref.load %arg1[%c0, %c0_0] : memref<1x1xf32, #tpu.memory_space<smem>>
    %1 = tpu.iota {dimensions = array<i32: 1>} : vector<8x128xi32>
    %c0_1 = arith.constant 0 : index
    %c0_2 = arith.constant 0 : index
    %2 = vector.load %arg2[%c0_1, %c0_2] : memref<8x1xi32, #tpu.memory_space<vmem>>, vector<8x1xi32>
    %3 = vector.broadcast %2 : vector<8x1xi32> to vector<8x128xi32>
    %4 = arith.cmpi eq, %1, %3 : vector<8x128xi32>
    %5 = arith.extui %4 : vector<8x128xi1> to vector<8x128xi32>
    %6 = arith.sitofp %5 : vector<8x128xi32> to vector<8x128xf32>
    %c0_3 = arith.constant 0 : index
    %c0_4 = arith.constant 0 : index
    %c0_5 = arith.constant 0 : index
    %7 = vector.load %arg3[%c0_3, %c0_4, %c0_5] : memref<6x128x128xf32, #tpu.memory_space<vmem>>, vector<1x128x128xf32>
    %8 = vector.shape_cast %7 : vector<1x128x128xf32> to vector<128x128xf32>
    %cst = arith.constant dense<0.000000e+00> : vector<8x128xf32>
    %9 = tpu.matmul %6, %8, %cst {dimension_numbers = #tpu.dot_dimension_numbers<[1], [0], [0], [1], [0, 0, 1, 1], [], []>} : vector<8x128xf32>, vector<128x128xf32>, vector<8x128xf32> -> vector<8x128xf32>
    %c0_6 = arith.constant 0 : index
    %c0_7 = arith.constant 0 : index
    %10 = vector.load %arg4[%c0_6, %c0_7] : memref<8x128xf32, #tpu.memory_space<vmem>>, vector<1x128xf32>
    %11 = vector.broadcast %10 : vector<1x128xf32> to vector<8x128xf32>
    %12 = arith.addf %9, %11 : vector<8x128xf32>
    %cst_8 = arith.constant 0.000000e+00 : f32
    %13 = vector.broadcast %cst_8 : f32 to vector<8x128xf32>
    %14 = arith.maximumf %12, %13 : vector<8x128xf32>
    %c1 = arith.constant 1 : index
    %c0_9 = arith.constant 0 : index
    %c0_10 = arith.constant 0 : index
    %15 = vector.load %arg3[%c1, %c0_9, %c0_10] : memref<6x128x128xf32, #tpu.memory_space<vmem>>, vector<1x128x128xf32>
    %16 = vector.shape_cast %15 : vector<1x128x128xf32> to vector<128x128xf32>
    %cst_11 = arith.constant dense<0.000000e+00> : vector<8x128xf32>
    %17 = tpu.matmul %14, %16, %cst_11 {dimension_numbers = #tpu.dot_dimension_numbers<[1], [0], [0], [1], [0, 0, 1, 1], [], []>} : vector<8x128xf32>, vector<128x128xf32>, vector<8x128xf32> -> vector<8x128xf32>
    %c1_12 = arith.constant 1 : index
    %c0_13 = arith.constant 0 : index
    %18 = vector.load %arg4[%c1_12, %c0_13] : memref<8x128xf32, #tpu.memory_space<vmem>>, vector<1x128xf32>
    %19 = vector.broadcast %18 : vector<1x128xf32> to vector<8x128xf32>
    %20 = arith.addf %17, %19 : vector<8x128xf32>
    %cst_14 = arith.constant 0.000000e+00 : f32
    %21 = vector.broadcast %cst_14 : f32 to vector<8x128xf32>
    %22 = arith.maximumf %20, %21 : vector<8x128xf32>
    %c2 = arith.constant 2 : index
    %c0_15 = arith.constant 0 : index
    %c0_16 = arith.constant 0 : index
    %23 = vector.load %arg3[%c2, %c0_15, %c0_16] : memref<6x128x128xf32, #tpu.memory_space<vmem>>, vector<1x128x128xf32>
    %24 = vector.shape_cast %23 : vector<1x128x128xf32> to vector<128x128xf32>
    %cst_17 = arith.constant dense<0.000000e+00> : vector<8x128xf32>
    %25 = tpu.matmul %22, %24, %cst_17 {dimension_numbers = #tpu.dot_dimension_numbers<[1], [0], [0], [1], [0, 0, 1, 1], [], []>} : vector<8x128xf32>, vector<128x128xf32>, vector<8x128xf32> -> vector<8x128xf32>
    %c2_18 = arith.constant 2 : index
    %c0_19 = arith.constant 0 : index
    %26 = vector.load %arg4[%c2_18, %c0_19] : memref<8x128xf32, #tpu.memory_space<vmem>>, vector<1x128xf32>
    %27 = vector.broadcast %26 : vector<1x128xf32> to vector<8x128xf32>
    %28 = arith.addf %25, %27 : vector<8x128xf32>
    %c104_i32 = arith.constant 104 : i32
    %29 = vector.broadcast %c104_i32 : i32 to vector<8x128xi32>
    %30 = arith.cmpi sge, %1, %29 : vector<8x128xi32>
    %c112_i32 = arith.constant 112 : i32
    %31 = vector.broadcast %c112_i32 : i32 to vector<8x128xi32>
    %32 = arith.cmpi slt, %1, %31 : vector<8x128xi32>
    %33 = arith.andi %30, %32 : vector<8x128xi1>
    %cst_20 = arith.constant 0.000000e+00 : f32
    %34 = vector.broadcast %cst_20 : f32 to vector<8x128xf32>
    %35 = arith.select %33, %28, %34 : vector<8x128xi1>, vector<8x128xf32>
    %cst_21 = arith.constant 5.000000e-01 : f32
    %36 = vector.broadcast %cst_21 : f32 to vector<8x128xf32>
    %37 = arith.mulf %36, %35 : vector<8x128xf32>
    %38 = math.exp %37 : vector<8x128xf32>
    %c0_22 = arith.constant 0 : index
    %c0_23 = arith.constant 0 : index
    %39 = vector.load %arg6[%c0_22, %c0_23] : memref<8x8xf32, #tpu.memory_space<vmem>>, vector<8x8xf32>
    %c0_24 = arith.constant 0 : index
    %c0_25 = arith.constant 0 : index
    %40 = vector.load %arg5[%c0_24, %c0_25] : memref<8x128xf32, #tpu.memory_space<vmem>>, vector<8x128xf32>
    %cst_26 = arith.constant dense<0.000000e+00> : vector<8x128xf32>
    %41 = tpu.matmul %39, %40, %cst_26 {dimension_numbers = #tpu.dot_dimension_numbers<[1], [0], [0], [1], [0, 0, 1, 1], [], []>} : vector<8x8xf32>, vector<8x128xf32>, vector<8x128xf32> -> vector<8x128xf32>
    %42 = vector.broadcast %0 : f32 to vector<8x128xf32>
    %43 = arith.mulf %41, %42 : vector<8x128xf32>
    %44 = arith.mulf %43, %38 : vector<8x128xf32>
    %45 = arith.select %33, %44, %28 : vector<8x128xi1>, vector<8x128xf32>
    %c3 = arith.constant 3 : index
    %c0_27 = arith.constant 0 : index
    %c0_28 = arith.constant 0 : index
    %46 = vector.load %arg3[%c3, %c0_27, %c0_28] : memref<6x128x128xf32, #tpu.memory_space<vmem>>, vector<1x128x128xf32>
    %47 = vector.shape_cast %46 : vector<1x128x128xf32> to vector<128x128xf32>
    %cst_29 = arith.constant dense<0.000000e+00> : vector<8x128xf32>
    %48 = tpu.matmul %45, %47, %cst_29 {dimension_numbers = #tpu.dot_dimension_numbers<[1], [0], [0], [1], [0, 0, 1, 1], [], []>} : vector<8x128xf32>, vector<128x128xf32>, vector<8x128xf32> -> vector<8x128xf32>
    %c3_30 = arith.constant 3 : index
    %c0_31 = arith.constant 0 : index
    %49 = vector.load %arg4[%c3_30, %c0_31] : memref<8x128xf32, #tpu.memory_space<vmem>>, vector<1x128xf32>
    %50 = vector.broadcast %49 : vector<1x128xf32> to vector<8x128xf32>
    %51 = arith.addf %48, %50 : vector<8x128xf32>
    %c32_i32 = arith.constant 32 : i32
    %52 = vector.broadcast %c32_i32 : i32 to vector<8x128xi32>
    %53 = arith.cmpi slt, %1, %52 : vector<8x128xi32>
    %cst_32 = arith.constant 0.000000e+00 : f32
    %54 = vector.broadcast %cst_32 : f32 to vector<8x128xf32>
    %55 = arith.maximumf %51, %54 : vector<8x128xf32>
    %56 = arith.select %53, %55, %51 : vector<8x128xi1>, vector<8x128xf32>
    %c4 = arith.constant 4 : index
    %c0_33 = arith.constant 0 : index
    %c0_34 = arith.constant 0 : index
    %57 = vector.load %arg3[%c4, %c0_33, %c0_34] : memref<6x128x128xf32, #tpu.memory_space<vmem>>, vector<1x128x128xf32>
    %58 = vector.shape_cast %57 : vector<1x128x128xf32> to vector<128x128xf32>
    %cst_35 = arith.constant dense<0.000000e+00> : vector<8x128xf32>
    %59 = tpu.matmul %56, %58, %cst_35 {dimension_numbers = #tpu.dot_dimension_numbers<[1], [0], [0], [1], [0, 0, 1, 1], [], []>} : vector<8x128xf32>, vector<128x128xf32>, vector<8x128xf32> -> vector<8x128xf32>
    %c4_36 = arith.constant 4 : index
    %c0_37 = arith.constant 0 : index
    %60 = vector.load %arg4[%c4_36, %c0_37] : memref<8x128xf32, #tpu.memory_space<vmem>>, vector<1x128xf32>
    %61 = vector.broadcast %60 : vector<1x128xf32> to vector<8x128xf32>
    %62 = arith.addf %59, %61 : vector<8x128xf32>
    %cst_38 = arith.constant 0.000000e+00 : f32
    %63 = vector.broadcast %cst_38 : f32 to vector<8x128xf32>
    %64 = arith.maximumf %62, %63 : vector<8x128xf32>
    %65 = arith.select %53, %64, %62 : vector<8x128xi1>, vector<8x128xf32>
    %c5 = arith.constant 5 : index
    %c0_39 = arith.constant 0 : index
    %c0_40 = arith.constant 0 : index
    %66 = vector.load %arg3[%c5, %c0_39, %c0_40] : memref<6x128x128xf32, #tpu.memory_space<vmem>>, vector<1x128x128xf32>
    %67 = vector.shape_cast %66 : vector<1x128x128xf32> to vector<128x128xf32>
    %cst_41 = arith.constant dense<0.000000e+00> : vector<8x128xf32>
    %68 = tpu.matmul %65, %67, %cst_41 {dimension_numbers = #tpu.dot_dimension_numbers<[1], [0], [0], [1], [0, 0, 1, 1], [], []>} : vector<8x128xf32>, vector<128x128xf32>, vector<8x128xf32> -> vector<8x128xf32>
    %c5_42 = arith.constant 5 : index
    %c0_43 = arith.constant 0 : index
    %69 = vector.load %arg4[%c5_42, %c0_43] : memref<8x128xf32, #tpu.memory_space<vmem>>, vector<1x128xf32>
    %70 = vector.broadcast %69 : vector<1x128xf32> to vector<8x128xf32>
    %71 = arith.addf %68, %70 : vector<8x128xf32>
    %cst_44 = arith.constant 0.000000e+00 : f32
    %72 = vector.broadcast %cst_44 : f32 to vector<8x128xf32>
    %73 = arith.maximumf %71, %72 : vector<8x128xf32>
    %c64_i32 = arith.constant 64 : i32
    %74 = vector.broadcast %c64_i32 : i32 to vector<8x128xi32>
    %75 = arith.cmpi sge, %1, %74 : vector<8x128xi32>
    %c96_i32 = arith.constant 96 : i32
    %76 = vector.broadcast %c96_i32 : i32 to vector<8x128xi32>
    %77 = arith.cmpi slt, %1, %76 : vector<8x128xi32>
    %78 = arith.andi %75, %77 : vector<8x128xi1>
    %cst_45 = arith.constant 0xFF800000 : f32
    %79 = vector.broadcast %cst_45 : f32 to vector<8x128xf32>
    %80 = arith.select %78, %62, %79 : vector<8x128xi1>, vector<8x128xf32>
    %cst_46 = arith.constant dense<0xFF800000> : vector<8xf32>
    %81 = vector.multi_reduction <maximumf>, %80, %cst_46 [1] : vector<8x128xf32> to vector<8xf32>
    %82 = vector.shape_cast %81 : vector<8xf32> to vector<8x1xf32>
    %83 = vector.broadcast %82 : vector<8x1xf32> to vector<8x128xf32>
    %84 = arith.subf %62, %83 : vector<8x128xf32>
    %85 = math.exp %84 : vector<8x128xf32>
    %cst_47 = arith.constant 0.000000e+00 : f32
    %86 = vector.broadcast %cst_47 : f32 to vector<8x128xf32>
    %87 = arith.select %78, %85, %86 : vector<8x128xi1>, vector<8x128xf32>
    %cst_48 = arith.constant dense<0.000000e+00> : vector<8xf32>
    %88 = vector.multi_reduction <add>, %87, %cst_48 [1] : vector<8x128xf32> to vector<8xf32>
    %89 = vector.shape_cast %88 : vector<8xf32> to vector<8x1xf32>
    %90 = tpu.reciprocal %89 : vector<8x1xf32> -> vector<8x1xf32>
    %91 = vector.broadcast %90 : vector<8x1xf32> to vector<8x128xf32>
    %92 = arith.mulf %87, %91 : vector<8x128xf32>
    %c32_i32_49 = arith.constant 32 : i32
    %93 = vector.broadcast %c32_i32_49 : i32 to vector<8x128xi32>
    %94 = arith.cmpi sge, %1, %93 : vector<8x128xi32>
    %c64_i32_50 = arith.constant 64 : i32
    %95 = vector.broadcast %c64_i32_50 : i32 to vector<8x128xi32>
    %96 = arith.cmpi slt, %1, %95 : vector<8x128xi32>
    %97 = arith.andi %94, %96 : vector<8x128xi1>
    %c16_i32 = arith.constant 16 : i32
    %98 = vector.broadcast %c16_i32 : i32 to vector<8x128xi32>
    %99 = arith.cmpi slt, %1, %98 : vector<8x128xi32>
    %cst_51 = arith.constant 0.000000e+00 : f32
    %100 = vector.broadcast %cst_51 : f32 to vector<8x128xf32>
    %101 = arith.select %99, %12, %100 : vector<8x128xi1>, vector<8x128xf32>
    %102 = arith.addf %101, %73 : vector<8x128xf32>
    %cst_52 = arith.constant 0.000000e+00 : f32
    %103 = vector.broadcast %cst_52 : f32 to vector<8x128xf32>
    %104 = arith.select %97, %62, %103 : vector<8x128xi1>, vector<8x128xf32>
    %105 = arith.addf %102, %104 : vector<8x128xf32>
    %106 = arith.addf %105, %92 : vector<8x128xf32>
    %107 = arith.addf %106, %28 : vector<8x128xf32>
    %c0_53 = arith.constant 0 : index
    %c0_54 = arith.constant 0 : index
    %108 = vector.load %arg7[%c0_53, %c0_54] : memref<8x128xf32, #tpu.memory_space<vmem>>, vector<8x128xf32>
    tpu.vector_store %arg7[%c0_53, %c0_54], %107 {strides = array<i32>} : memref<8x128xf32, #tpu.memory_space<vmem>>, vector<8x128xf32>,
    return
  }
  func.func @transform_0(%arg0: i32) -> (i32, i32) {
    %c0_i32 = arith.constant 0 : i32
    %c0_i32_0 = arith.constant 0 : i32
    %c0_i32_1 = arith.constant 0 : i32
    return %c0_i32, %c0_i32_0 : i32, i32
  }
  func.func @transform_1(%arg0: i32) -> (i32, i32) {
    %c0_i32 = arith.constant 0 : i32
    %c0_i32_0 = arith.constant 0 : i32
    return %arg0, %c0_i32 : i32, i32
  }
  func.func @transform_2(%arg0: i32) -> (i32, i32, i32) {
    %c0_i32 = arith.constant 0 : i32
    %c0_i32_0 = arith.constant 0 : i32
    %c0_i32_1 = arith.constant 0 : i32
    %c0_i32_2 = arith.constant 0 : i32
    return %c0_i32, %c0_i32_0, %c0_i32_1 : i32, i32, i32
  }
  func.func @transform_3(%arg0: i32) -> (i32, i32) {
    %c0_i32 = arith.constant 0 : i32
    %c0_i32_0 = arith.constant 0 : i32
    %c0_i32_1 = arith.constant 0 : i32
    return %c0_i32, %c0_i32_0 : i32, i32
  }
  func.func @transform_4(%arg0: i32) -> (i32, i32) {
    %c0_i32 = arith.constant 0 : i32
    %c0_i32_0 = arith.constant 0 : i32
    %c0_i32_1 = arith.constant 0 : i32
    return %c0_i32, %c0_i32_0 : i32, i32
  }
  func.func @transform_5(%arg0: i32) -> (i32, i32) {
    %c0_i32 = arith.constant 0 : i32
    %c0_i32_0 = arith.constant 0 : i32
    return %arg0, %c0_i32 : i32, i32
  }
  func.func @transform_6(%arg0: i32) -> (i32, i32) {
    %c0_i32 = arith.constant 0 : i32
    %c0_i32_0 = arith.constant 0 : i32
    return %arg0, %c0_i32 : i32, i32
  }
}

</mosaic_0001>

<llo_original>
// kernel: tpu_custom_call.1
$region0: #{tpu_custom_call.1}
  #allocation0 [shape = 'u32[]', space=smem, size = 0x4, offset = 0x4, fixed_abs, tag = 'smem constant byte address 0x4 - core index']
  #allocation1 [shape = 'u32[144,128]{1,0:T(1,128)}', space=vmem, size = 0x12000, scoped, tag = 'internal scratch']
  #allocation2 [shape = 'f32[1,1]{1,0:T(1,128)S(6)}', space=smem, size = 0x200, scoped, tag = 'scoped memory for tpu_custom_call.1']
  %s0 = inlined_call_operand.<no memory space> [shape: f32[1,1], index: 0, kind: input, shape index: {}]
  %s1 = inlined_call_operand.vmem [shape: s32[8,1], index: 1, kind: input, shape index: {}]
  %s2 = inlined_call_operand.hbm [shape: f32[6,128,128], index: 2, kind: input, shape index: {}]
  %s3 = inlined_call_operand.vmem [shape: f32[8,128], index: 3, kind: input, shape index: {}]
  %s4 = inlined_call_operand.vmem [shape: f32[8,128], index: 4, kind: input, shape index: {}]
  %s5 = inlined_call_operand.vmem [shape: f32[8,8], index: 5, kind: input, shape index: {}]
  %s6 = inlined_call_operand.hbm [shape: f32[8,128], index: 6, kind: output, shape index: {}]
  %s7 = sld [smem:[#allocation0]]
  $region38: #{tpu_custom_call.1} parent=0
    _
  %s9 = ssub.s32 1, %s7
  %s10 = scalar_select 0, %s9, %s7
  %11 = sst [smem:[#allocation2]] %s0
  $region1: #{tpu_custom_call.1} parent=0
    #allocation3 [shape = 'u8[393216]{0}', space=vmem, size = 0x60000, scoped, tag = 'input window, operand 2, single buffered']
    #allocation4 [shape = 's32[1]{0}', space=sflag, size = 0x4, scoped, tag = 'scoped memory for tpu_custom_call.1']
    #allocation5 [shape = 's32[1]{0}', space=sflag, size = 0x4, scoped, tag = 'scoped memory for tpu_custom_call.1']
    #allocation6 [shape = 'u8[4096]{0}', space=vmem, size = 0x1000, scoped, tag = 'output window, operand 0, single buffered']
    %12 = vsyncpa [#allocation4], 0
    %13 = vsyncpa [#allocation5], 0
    // Predicated region
    $region2: #{tpu_custom_call.1} parent=1 // pred_check
      _
    $region3: #{tpu_custom_call.1} parent=1 // pred_check_branch
      %15 = sbr.rel (0) target = $region5
    $region4: #{tpu_custom_call.1} parent=1 // pred_region
      _
    $region5: #{tpu_custom_call.1} parent=1 // pred_fallthru
      _
    // Predicated region
    $region6: #{tpu_custom_call.1} parent=1 // pred_check
      _
    $region7: #{tpu_custom_call.1} parent=1 // pred_check_branch
      %17 = sbr.rel (0) target = $region9
    $region8: #{tpu_custom_call.1} parent=1 // pred_region
      _
    $region9: #{tpu_custom_call.1} parent=1 // pred_fallthru
      _
    // Predicated region
    $region10: #{tpu_custom_call.1} parent=1 // pred_check
      _
    $region11: #{tpu_custom_call.1} parent=1 // pred_check_branch
      %19 = sbr.rel (0) target = $region13
    $region12: #{tpu_custom_call.1} parent=1 // pred_region
      %s21 = ssub.s32 12288, 12288
      %22 = vsyncadd [#allocation4], %s21
      %s23 = sshll.u32 [#allocation3], 4
      %s24 = int_to_ptr.vmem [resolvable:$true] %s23
      %29 = dma.hbm_to_vmem [thread:$0]  %s2, 12288, %s24, [#allocation4], 128, 128, 8
    $region13: #{tpu_custom_call.1} parent=1 // pred_fallthru
      _
    // Predicated region
    $region14: #{tpu_custom_call.1} parent=1 // pred_check
      _
    $region15: #{tpu_custom_call.1} parent=1 // pred_check_branch
      %31 = sbr.rel (0) target = $region17
    $region16: #{tpu_custom_call.1} parent=1 // pred_region
      _
    $region17: #{tpu_custom_call.1} parent=1 // pred_fallthru
      _
    // Predicated region
    $region18: #{tpu_custom_call.1} parent=1 // pred_check
      _
    $region19: #{tpu_custom_call.1} parent=1 // pred_check_branch
      %33 = sbr.rel (0) target = $region21
    $region20: #{tpu_custom_call.1} parent=1 // pred_region
      _
    $region21: #{tpu_custom_call.1} parent=1 // pred_fallthru
      _
    // Predicated region
    $region22: #{tpu_custom_call.1} parent=1 // pred_check
      _
    $region23: #{tpu_custom_call.1} parent=1 // pred_check_branch
      %35 = sbr.rel (0) target = $region25
    $region24: #{tpu_custom_call.1} parent=1 // pred_region
      _
    $region25: #{tpu_custom_call.1} parent=1 // pred_fallthru
      _
    // Predicated region
    $region26: #{tpu_custom_call.1} parent=1 // pred_check
      _
    $region27: #{tpu_custom_call.1} parent=1 // pred_check_branch
      %37 = sbr.rel (0) target = $region29
    $region28: #{tpu_custom_call.1} parent=1 // pred_region
      %38 = dma.done [#allocation4], 12288
    $region29: #{tpu_custom_call.1} parent=1 // pred_fallthru
      _
    %s39 = sld [smem:[#allocation2]]
    %v40 = vlaneseq
    %v41 = vand.u32 %v40, 127
    %v42 = vld [vmem:[%s1] sm:$0xff]
    %43 = vset.pattern.permute.xlu0 0
    %44 = vperm.xlu0 %43, %v42
    %v45 = vpop.permute.xlu0 %44
    %vm46 = vcmp.eq.s32.totalorder %v41, %v45
    %v47 = vsel %vm46, 1, 0
    %v48 = vcvt.s32.f32 %v47
    %v49 = vld [vmem:[#allocation3] sm:$0xff]
    %v50 = vld [vmem:[#allocation3 + $0x8] sm:$0xff]
    %v51 = vld [vmem:[#allocation3 + $0x10] sm:$0xff]
    %v52 = vld [vmem:[#allocation3 + $0x18] sm:$0xff]
    %v53 = vld [vmem:[#allocation3 + $0x20] sm:$0xff]
    %v54 = vld [vmem:[#allocation3 + $0x28] sm:$0xff]
    %v55 = vld [vmem:[#allocation3 + $0x30] sm:$0xff]
    %v56 = vld [vmem:[#allocation3 + $0x38] sm:$0xff]
    %v57 = vld [vmem:[#allocation3 + $0x40] sm:$0xff]
    %v58 = vld [vmem:[#allocation3 + $0x48] sm:$0xff]
    %v59 = vld [vmem:[#allocation3 + $0x50] sm:$0xff]
    %v60 = vld [vmem:[#allocation3 + $0x58] sm:$0xff]
    %v61 = vld [vmem:[#allocation3 + $0x60] sm:$0xff]
    %v62 = vld [vmem:[#allocation3 + $0x68] sm:$0xff]
    %v63 = vld [vmem:[#allocation3 + $0x70] sm:$0xff]
    %v64 = vld [vmem:[#allocation3 + $0x78] sm:$0xff]
    %v65 = vld [vmem:[%s3] sm:$0x1]
    %v66 = vlaneseq
    %v67 = vshrl.u32 %v66, 7
    %v68 = vsub.s32 0, %v67
    %v69 = vrot.slane %v65, %v68
    %70 = vmatprep.subr.mxu0 0.0
    %71 = vmatpush1.msra.mxu0 %v49
    %72 = vmatprep.subr.mxu0 0.0
    %73 = vmatpush1.msra.mxu0 %v50
    %74 = vmatprep.subr.mxu0 0.0
    %75 = vmatpush1.msra.mxu0 %v51
    %76 = vmatprep.subr.mxu0 0.0
    %77 = vmatpush1.msra.mxu0 %v52
    %78 = vmatprep.subr.mxu0 0.0
    %79 = vmatpush1.msra.mxu0 %v53
    %80 = vmatprep.subr.mxu0 0.0
    %81 = vmatpush1.msra.mxu0 %v54
    %82 = vmatprep.subr.mxu0 0.0
    %83 = vmatpush1.msra.mxu0 %v55
    %84 = vmatprep.subr.mxu0 0.0
    %85 = vmatpush1.msra.mxu0 %v56
    %86 = vmatprep.subr.mxu0 0.0
    %87 = vmatpush1.msra.mxu0 %v57
    %88 = vmatprep.subr.mxu0 0.0
    %89 = vmatpush1.msra.mxu0 %v58
    %90 = vmatprep.subr.mxu0 0.0
    %91 = vmatpush1.msra.mxu0 %v59
    %92 = vmatprep.subr.mxu0 0.0
    %93 = vmatpush1.msra.mxu0 %v60
    %94 = vmatprep.subr.mxu0 0.0
    %95 = vmatpush1.msra.mxu0 %v61
    %96 = vmatprep.subr.mxu0 0.0
    %97 = vmatpush1.msra.mxu0 %v62
    %98 = vmatprep.subr.mxu0 0.0
    %99 = vmatpush1.msra.mxu0 %v63
    %100 = vmatprep.subr.mxu0 0.0
    %101 = vmatpush1.msra.mxu0 %v64
    %102 = vmatprep.subr.mxu0 0.0
    %103 = vmatpush1.msra.mxu0 0.0
    %104 = vmatprep.subr.mxu0 0.0
    %105 = vmatpush1.msra.mxu0 0.0
    %106 = vmatprep.subr.mxu0 0.0
    %107 = vmatpush1.msra.mxu0 0.0
    %108 = vmatprep.subr.mxu0 0.0
    %109 = vmatpush1.msra.mxu0 0.0
    %110 = vmatprep.subr.mxu0 0.0
    %111 = vmatpush1.msra.mxu0 0.0
    %112 = vmatprep.subr.mxu0 0.0
    %113 = vmatpush1.msra.mxu0 0.0
    %114 = vmatprep.subr.mxu0 0.0
    %115 = vmatpush1.msra.mxu0 0.0
    %116 = vmatprep.subr.mxu0 0.0
    %117 = vmatpush1.msra.mxu0 0.0
    %118 = vmatprep.subr.mxu0 0.0
    %119 = vmatpush1.msra.mxu0 0.0
    %120 = vmatprep.subr.mxu0 0.0
    %121 = vmatpush1.msra.mxu0 0.0
    %122 = vmatprep.subr.mxu0 0.0
    %123 = vmatpush1.msra.mxu0 0.0
    %124 = vmatprep.subr.mxu0 0.0
    %125 = vmatpush1.msra.mxu0 0.0
    %126 = vmatprep.subr.mxu0 0.0
    %127 = vmatpush1.msra.mxu0 0.0
    %128 = vmatprep.subr.mxu0 0.0
    %129 = vmatpush1.msra.mxu0 0.0
    %130 = vmatprep.subr.mxu0 0.0
    %131 = vmatpush1.msra.mxu0 0.0
    %132 = vmatprep.subr.mxu0 0.0
    %133 = vmatpush1.msra.mxu0 0.0
    %134 = vmatprep.mubr.f32.mxu0 0.0
    %135 = vmatmul.mubr.f32.gmra.mrb[0].mxu0 %v48
    %v136 = vpop.f32.mrb[0].mxu0
    %v137 = vadd.f32 %v69, %v136
    %v138 = vpop.f32.mrb[0].mxu0
    %139 = vdwg.mxu0
    %v140 = vmax.f32 %v137, 0.0
    %s141 = scalar_lea.vmem [#allocation3], 128
    %v142 = vld [vmem:[%s141] sm:$0xff]
    %v143 = vld [vmem:[%s141 + $0x8] sm:$0xff]
    %v144 = vld [vmem:[%s141 + $0x10] sm:$0xff]
    %v145 = vld [vmem:[%s141 + $0x18] sm:$0xff]
    %v146 = vld [vmem:[%s141 + $0x20] sm:$0xff]
    %v147 = vld [vmem:[%s141 + $0x28] sm:$0xff]
    %v148 = vld [vmem:[%s141 + $0x30] sm:$0xff]
    %v149 = vld [vmem:[%s141 + $0x38] sm:$0xff]
    %v150 = vld [vmem:[%s141 + $0x40] sm:$0xff]
    %v151 = vld [vmem:[%s141 + $0x48] sm:$0xff]
    %v152 = vld [vmem:[%s141 + $0x50] sm:$0xff]
    %v153 = vld [vmem:[%s141 + $0x58] sm:$0xff]
    %v154 = vld [vmem:[%s141 + $0x60] sm:$0xff]
    %v155 = vld [vmem:[%s141 + $0x68] sm:$0xff]
    %v156 = vld [vmem:[%s141 + $0x70] sm:$0xff]
    %v157 = vld [vmem:[%s141 + $0x78] sm:$0xff]
    %v158 = vld [vmem:[%s3 + $0x1] sm:$0x1]
    %v159 = vlaneseq
    %v160 = vshrl.u32 %v159, 7
    %v161 = vsub.s32 0, %v160
    %v162 = vrot.slane %v158, %v161
    %163 = vmatprep.subr.mxu0 0.0
    %164 = vmatpush1.msra.mxu0 %v142
    %165 = vmatprep.subr.mxu0 0.0
    %166 = vmatpush1.msra.mxu0 %v143
    %167 = vmatprep.subr.mxu0 0.0
    %168 = vmatpush1.msra.mxu0 %v144
    %169 = vmatprep.subr.mxu0 0.0
    %170 = vmatpush1.msra.mxu0 %v145
    %171 = vmatprep.subr.mxu0 0.0
    %172 = vmatpush1.msra.mxu0 %v146
    %173 = vmatprep.subr.mxu0 0.0
    %174 = vmatpush1.msra.mxu0 %v147
    %175 = vmatprep.subr.mxu0 0.0
    %176 = vmatpush1.msra.mxu0 %v148
    %177 = vmatprep.subr.mxu0 0.0
    %178 = vmatpush1.msra.mxu0 %v149
    %179 = vmatprep.subr.mxu0 0.0
    %180 = vmatpush1.msra.mxu0 %v150
    %181 = vmatprep.subr.mxu0 0.0
    %182 = vmatpush1.msra.mxu0 %v151
    %183 = vmatprep.subr.mxu0 0.0
    %184 = vmatpush1.msra.mxu0 %v152
    %185 = vmatprep.subr.mxu0 0.0
    %186 = vmatpush1.msra.mxu0 %v153
    %187 = vmatprep.subr.mxu0 0.0
    %188 = vmatpush1.msra.mxu0 %v154
    %189 = vmatprep.subr.mxu0 0.0
    %190 = vmatpush1.msra.mxu0 %v155
    %191 = vmatprep.subr.mxu0 0.0
    %192 = vmatpush1.msra.mxu0 %v156
    %193 = vmatprep.subr.mxu0 0.0
    %194 = vmatpush1.msra.mxu0 %v157
    %195 = vmatprep.subr.mxu0 0.0
    %196 = vmatpush1.msra.mxu0 0.0
    %197 = vmatprep.subr.mxu0 0.0
    %198 = vmatpush1.msra.mxu0 0.0
    %199 = vmatprep.subr.mxu0 0.0
    %200 = vmatpush1.msra.mxu0 0.0
    %201 = vmatprep.subr.mxu0 0.0
    %202 = vmatpush1.msra.mxu0 0.0
    %203 = vmatprep.subr.mxu0 0.0
    %204 = vmatpush1.msra.mxu0 0.0
    %205 = vmatprep.subr.mxu0 0.0
    %206 = vmatpush1.msra.mxu0 0.0
    %207 = vmatprep.subr.mxu0 0.0
    %208 = vmatpush1.msra.mxu0 0.0
    %209 = vmatprep.subr.mxu0 0.0
    %210 = vmatpush1.msra.mxu0 0.0
    %211 = vmatprep.subr.mxu0 0.0
    %212 = vmatpush1.msra.mxu0 0.0
    %213 = vmatprep.subr.mxu0 0.0
    %214 = vmatpush1.msra.mxu0 0.0
    %215 = vmatprep.subr.mxu0 0.0
    %216 = vmatpush1.msra.mxu0 0.0
    %217 = vmatprep.subr.mxu0 0.0
    %218 = vmatpush1.msra.mxu0 0.0
    %219 = vmatprep.subr.mxu0 0.0
    %220 = vmatpush1.msra.mxu0 0.0
    %221 = vmatprep.subr.mxu0 0.0
    %222 = vmatpush1.msra.mxu0 0.0
    %223 = vmatprep.subr.mxu0 0.0
    %224 = vmatpush1.msra.mxu0 0.0
    %225 = vmatprep.subr.mxu0 0.0
    %226 = vmatpush1.msra.mxu0 0.0
    %227 = vmatprep.mubr.f32.mxu0 0.0
    %228 = vmatmul.mubr.f32.gmra.mrb[0].mxu0 %v140
    %v229 = vpop.f32.mrb[0].mxu0
    %v230 = vadd.f32 %v162, %v229
    %v231 = vpop.f32.mrb[0].mxu0
    %232 = vdwg.mxu0
    %v233 = vmax.f32 %v230, 0.0
    %s234 = scalar_lea.vmem [#allocation3], 256
    %v235 = vld [vmem:[%s234] sm:$0xff]
    %v236 = vld [vmem:[%s234 + $0x8] sm:$0xff]
    %v237 = vld [vmem:[%s234 + $0x10] sm:$0xff]
    %v238 = vld [vmem:[%s234 + $0x18] sm:$0xff]
    %v239 = vld [vmem:[%s234 + $0x20] sm:$0xff]
    %v240 = vld [vmem:[%s234 + $0x28] sm:$0xff]
    %v241 = vld [vmem:[%s234 + $0x30] sm:$0xff]
    %v242 = vld [vmem:[%s234 + $0x38] sm:$0xff]
    %v243 = vld [vmem:[%s234 + $0x40] sm:$0xff]
    %v244 = vld [vmem:[%s234 + $0x48] sm:$0xff]
    %v245 = vld [vmem:[%s234 + $0x50] sm:$0xff]
    %v246 = vld [vmem:[%s234 + $0x58] sm:$0xff]
    %v247 = vld [vmem:[%s234 + $0x60] sm:$0xff]
    %v248 = vld [vmem:[%s234 + $0x68] sm:$0xff]
    %v249 = vld [vmem:[%s234 + $0x70] sm:$0xff]
    %v250 = vld [vmem:[%s234 + $0x78] sm:$0xff]
    %v251 = vld [vmem:[%s3 + $0x2] sm:$0x1]
    %v252 = vlaneseq
    %v253 = vshrl.u32 %v252, 7
    %v254 = vsub.s32 0, %v253
    %v255 = vrot.slane %v251, %v254
    %256 = vmatprep.subr.mxu0 0.0
    %257 = vmatpush1.msra.mxu0 %v235
    %258 = vmatprep.subr.mxu0 0.0
    %259 = vmatpush1.msra.mxu0 %v236
    %260 = vmatprep.subr.mxu0 0.0
    %261 = vmatpush1.msra.mxu0 %v237
    %262 = vmatprep.subr.mxu0 0.0
    %263 = vmatpush1.msra.mxu0 %v238
    %264 = vmatprep.subr.mxu0 0.0
    %265 = vmatpush1.msra.mxu0 %v239
    %266 = vmatprep.subr.mxu0 0.0
    %267 = vmatpush1.msra.mxu0 %v240
    %268 = vmatprep.subr.mxu0 0.0
    %269 = vmatpush1.msra.mxu0 %v241
    %270 = vmatprep.subr.mxu0 0.0
    %271 = vmatpush1.msra.mxu0 %v242
    %272 = vmatprep.subr.mxu0 0.0
    %273 = vmatpush1.msra.mxu0 %v243
    %274 = vmatprep.subr.mxu0 0.0
    %275 = vmatpush1.msra.mxu0 %v244
    %276 = vmatprep.subr.mxu0 0.0
    %277 = vmatpush1.msra.mxu0 %v245
    %278 = vmatprep.subr.mxu0 0.0
    %279 = vmatpush1.msra.mxu0 %v246
    %280 = vmatprep.subr.mxu0 0.0
    %281 = vmatpush1.msra.mxu0 %v247
    %282 = vmatprep.subr.mxu0 0.0
    %283 = vmatpush1.msra.mxu0 %v248
    %284 = vmatprep.subr.mxu0 0.0
    %285 = vmatpush1.msra.mxu0 %v249
    %286 = vmatprep.subr.mxu0 0.0
    %287 = vmatpush1.msra.mxu0 %v250
    %288 = vmatprep.subr.mxu0 0.0
    %289 = vmatpush1.msra.mxu0 0.0
    %290 = vmatprep.subr.mxu0 0.0
    %291 = vmatpush1.msra.mxu0 0.0
    %292 = vmatprep.subr.mxu0 0.0
    %293 = vmatpush1.msra.mxu0 0.0
    %294 = vmatprep.subr.mxu0 0.0
    %295 = vmatpush1.msra.mxu0 0.0
    %296 = vmatprep.subr.mxu0 0.0
    %297 = vmatpush1.msra.mxu0 0.0
    %298 = vmatprep.subr.mxu0 0.0
    %299 = vmatpush1.msra.mxu0 0.0
    %300 = vmatprep.subr.mxu0 0.0
    %301 = vmatpush1.msra.mxu0 0.0
    %302 = vmatprep.subr.mxu0 0.0
    %303 = vmatpush1.msra.mxu0 0.0
    %304 = vmatprep.subr.mxu0 0.0
    %305 = vmatpush1.msra.mxu0 0.0
    %306 = vmatprep.subr.mxu0 0.0
    %307 = vmatpush1.msra.mxu0 0.0
    %308 = vmatprep.subr.mxu0 0.0
    %309 = vmatpush1.msra.mxu0 0.0
    %310 = vmatprep.subr.mxu0 0.0
    %311 = vmatpush1.msra.mxu0 0.0
    %312 = vmatprep.subr.mxu0 0.0
    %313 = vmatpush1.msra.mxu0 0.0
    %314 = vmatprep.subr.mxu0 0.0
    %315 = vmatpush1.msra.mxu0 0.0
    %316 = vmatprep.subr.mxu0 0.0
    %317 = vmatpush1.msra.mxu0 0.0
    %318 = vmatprep.subr.mxu0 0.0
    %319 = vmatpush1.msra.mxu0 0.0
    %320 = vmatprep.mubr.f32.mxu0 0.0
    %321 = vmatmul.mubr.f32.gmra.mrb[0].mxu0 %v233
    %v322 = vpop.f32.mrb[0].mxu0
    %v323 = vadd.f32 %v255, %v322
    %v324 = vpop.f32.mrb[0].mxu0
    %325 = vdwg.mxu0
    %vm326 = vcmp.ge.s32.totalorder %v41, 104
    %vm327 = vcmp.lt.s32.totalorder %v41, 112
    %vm328 = vmand %vm326, %vm327
    %v329 = vsel %vm328, %v323, 0.0
    %v330 = vmul.f32 %v329, 0.5
    %v331 = vmul.f32 %v330, 1.442695
    %v332 = vpow.pop %v331
    %v333 = vld [vmem:[%s5] sm:$0xff]
    %v334 = vld [vmem:[%s4] sm:$0xff]
    %vm335 = vcmask 64512
    %v337 = vsel %vm335, %v333, 0
    %339 = vmatprep.subr.mxu0 0.0
    %340 = vmatpush1.msra.mxu0 %v334
    %341 = vmatprep.subr.mxu0 0.0
    %342 = vmatpush1.msra.mxu0 0.0
    %343 = vmatprep.subr.mxu0 0.0
    %344 = vmatpush1.msra.mxu0 0.0
    %345 = vmatprep.subr.mxu0 0.0
    %346 = vmatpush1.msra.mxu0 0.0
    %347 = vmatprep.subr.mxu0 0.0
    %348 = vmatpush1.msra.mxu0 0.0
    %349 = vmatprep.subr.mxu0 0.0
    %350 = vmatpush1.msra.mxu0 0.0
    %351 = vmatprep.subr.mxu0 0.0
    %352 = vmatpush1.msra.mxu0 0.0
    %353 = vmatprep.subr.mxu0 0.0
    %354 = vmatpush1.msra.mxu0 0.0
    %355 = vmatprep.subr.mxu0 0.0
    %356 = vmatpush1.msra.mxu0 0.0
    %357 = vmatprep.subr.mxu0 0.0
    %358 = vmatpush1.msra.mxu0 0.0
    %359 = vmatprep.subr.mxu0 0.0
    %360 = vmatpush1.msra.mxu0 0.0
    %361 = vmatprep.subr.mxu0 0.0
    %362 = vmatpush1.msra.mxu0 0.0
    %363 = vmatprep.subr.mxu0 0.0
    %364 = vmatpush1.msra.mxu0 0.0
    %365 = vmatprep.subr.mxu0 0.0
    %366 = vmatpush1.msra.mxu0 0.0
    %367 = vmatprep.subr.mxu0 0.0
    %368 = vmatpush1.msra.mxu0 0.0
    %369 = vmatprep.subr.mxu0 0.0
    %370 = vmatpush1.msra.mxu0 0.0
    %371 = vmatprep.subr.mxu0 0.0
    %372 = vmatpush1.msra.mxu0 0.0
    %373 = vmatprep.subr.mxu0 0.0
    %374 = vmatpush1.msra.mxu0 0.0
    %375 = vmatprep.subr.mxu0 0.0
    %376 = vmatpush1.msra.mxu0 0.0
    %377 = vmatprep.subr.mxu0 0.0
    %378 = vmatpush1.msra.mxu0 0.0
    %379 = vmatprep.subr.mxu0 0.0
    %380 = vmatpush1.msra.mxu0 0.0
    %381 = vmatprep.subr.mxu0 0.0
    %382 = vmatpush1.msra.mxu0 0.0
    %383 = vmatprep.subr.mxu0 0.0
    %384 = vmatpush1.msra.mxu0 0.0
    %385 = vmatprep.subr.mxu0 0.0
    %386 = vmatpush1.msra.mxu0 0.0
    %387 = vmatprep.subr.mxu0 0.0
    %388 = vmatpush1.msra.mxu0 0.0
    %389 = vmatprep.subr.mxu0 0.0
    %390 = vmatpush1.msra.mxu0 0.0
    %391 = vmatprep.subr.mxu0 0.0
    %392 = vmatpush1.msra.mxu0 0.0
    %393 = vmatprep.subr.mxu0 0.0
    %394 = vmatpush1.msra.mxu0 0.0
    %395 = vmatprep.subr.mxu0 0.0
    %396 = vmatpush1.msra.mxu0 0.0
    %397 = vmatprep.subr.mxu0 0.0
    %398 = vmatpush1.msra.mxu0 0.0
    %399 = vmatprep.subr.mxu0 0.0
    %400 = vmatpush1.msra.mxu0 0.0
    %401 = vmatprep.subr.mxu0 0.0
    %402 = vmatpush1.msra.mxu0 0.0
    %403 = vmatprep.mubr.f32.mxu0 0.0
    %404 = vmatmul.mubr.f32.gmra.mrb[0].mxu0 %v337
    %v405 = vpop.f32.mrb[0].mxu0
    %v406 = vadd.f32 0.0, %v405
    %v407 = vpop.f32.mrb[0].mxu0
    %408 = vdwg.mxu0
    %v409 = vstv %s39
    %v410 = vmul.f32 %v406, %v409
    %v411 = vmul.f32 %v410, %v332
    %v412 = vsel %vm328, %v411, %v323
    %s413 = scalar_lea.vmem [#allocation3], 384
    %v414 = vld [vmem:[%s413] sm:$0xff]
    %v415 = vld [vmem:[%s413 + $0x8] sm:$0xff]
    %v416 = vld [vmem:[%s413 + $0x10] sm:$0xff]
    %v417 = vld [vmem:[%s413 + $0x18] sm:$0xff]
    %v418 = vld [vmem:[%s413 + $0x20] sm:$0xff]
    %v419 = vld [vmem:[%s413 + $0x28] sm:$0xff]
    %v420 = vld [vmem:[%s413 + $0x30] sm:$0xff]
    %v421 = vld [vmem:[%s413 + $0x38] sm:$0xff]
    %v422 = vld [vmem:[%s413 + $0x40] sm:$0xff]
    %v423 = vld [vmem:[%s413 + $0x48] sm:$0xff]
    %v424 = vld [vmem:[%s413 + $0x50] sm:$0xff]
    %v425 = vld [vmem:[%s413 + $0x58] sm:$0xff]
    %v426 = vld [vmem:[%s413 + $0x60] sm:$0xff]
    %v427 = vld [vmem:[%s413 + $0x68] sm:$0xff]
    %v428 = vld [vmem:[%s413 + $0x70] sm:$0xff]
    %v429 = vld [vmem:[%s413 + $0x78] sm:$0xff]
    %v430 = vld [vmem:[%s3 + $0x3] sm:$0x1]
    %v431 = vlaneseq
    %v432 = vshrl.u32 %v431, 7
    %v433 = vsub.s32 0, %v432
    %v434 = vrot.slane %v430, %v433
    %435 = vmatprep.subr.mxu0 0.0
    %436 = vmatpush1.msra.mxu0 %v414
    %437 = vmatprep.subr.mxu0 0.0
    %438 = vmatpush1.msra.mxu0 %v415
    %439 = vmatprep.subr.mxu0 0.0
    %440 = vmatpush1.msra.mxu0 %v416
    %441 = vmatprep.subr.mxu0 0.0
    %442 = vmatpush1.msra.mxu0 %v417
    %443 = vmatprep.subr.mxu0 0.0
    %444 = vmatpush1.msra.mxu0 %v418
    %445 = vmatprep.subr.mxu0 0.0
    %446 = vmatpush1.msra.mxu0 %v419
    %447 = vmatprep.subr.mxu0 0.0
    %448 = vmatpush1.msra.mxu0 %v420
    %449 = vmatprep.subr.mxu0 0.0
    %450 = vmatpush1.msra.mxu0 %v421
    %451 = vmatprep.subr.mxu0 0.0
    %452 = vmatpush1.msra.mxu0 %v422
    %453 = vmatprep.subr.mxu0 0.0
    %454 = vmatpush1.msra.mxu0 %v423
    %455 = vmatprep.subr.mxu0 0.0
    %456 = vmatpush1.msra.mxu0 %v424
    %457 = vmatprep.subr.mxu0 0.0
    %458 = vmatpush1.msra.mxu0 %v425
    %459 = vmatprep.subr.mxu0 0.0
    %460 = vmatpush1.msra.mxu0 %v426
    %461 = vmatprep.subr.mxu0 0.0
    %462 = vmatpush1.msra.mxu0 %v427
    %463 = vmatprep.subr.mxu0 0.0
    %464 = vmatpush1.msra.mxu0 %v428
    %465 = vmatprep.subr.mxu0 0.0
    %466 = vmatpush1.msra.mxu0 %v429
    %467 = vmatprep.subr.mxu0 0.0
    %468 = vmatpush1.msra.mxu0 0.0
    %469 = vmatprep.subr.mxu0 0.0
    %470 = vmatpush1.msra.mxu0 0.0
    %471 = vmatprep.subr.mxu0 0.0
    %472 = vmatpush1.msra.mxu0 0.0
    %473 = vmatprep.subr.mxu0 0.0
    %474 = vmatpush1.msra.mxu0 0.0
    %475 = vmatprep.subr.mxu0 0.0
    %476 = vmatpush1.msra.mxu0 0.0
    %477 = vmatprep.subr.mxu0 0.0
    %478 = vmatpush1.msra.mxu0 0.0
    %479 = vmatprep.subr.mxu0 0.0
    %480 = vmatpush1.msra.mxu0 0.0
    %481 = vmatprep.subr.mxu0 0.0
    %482 = vmatpush1.msra.mxu0 0.0
    %483 = vmatprep.subr.mxu0 0.0
    %484 = vmatpush1.msra.mxu0 0.0
    %485 = vmatprep.subr.mxu0 0.0
    %486 = vmatpush1.msra.mxu0 0.0
    %487 = vmatprep.subr.mxu0 0.0
    %488 = vmatpush1.msra.mxu0 0.0
    %489 = vmatprep.subr.mxu0 0.0
    %490 = vmatpush1.msra.mxu0 0.0
    %491 = vmatprep.subr.mxu0 0.0
    %492 = vmatpush1.msra.mxu0 0.0
    %493 = vmatprep.subr.mxu0 0.0
    %494 = vmatpush1.msra.mxu0 0.0
    %495 = vmatprep.subr.mxu0 0.0
    %496 = vmatpush1.msra.mxu0 0.0
    %497 = vmatprep.subr.mxu0 0.0
    %498 = vmatpush1.msra.mxu0 0.0
    %499 = vmatprep.mubr.f32.mxu0 0.0
    %500 = vmatmul.mubr.f32.gmra.mrb[0].mxu0 %v412
    %v501 = vpop.f32.mrb[0].mxu0
    %v502 = vadd.f32 %v434, %v501
    %v503 = vpop.f32.mrb[0].mxu0
    %504 = vdwg.mxu0
    %vm505 = vcmp.lt.s32.totalorder %v41, 32
    %v506 = vmax.f32 %v502, 0.0
    %v507 = vsel %vm505, %v506, %v502
    %s508 = scalar_lea.vmem [#allocation3], 512
    %v509 = vld [vmem:[%s508] sm:$0xff]
    %v510 = vld [vmem:[%s508 + $0x8] sm:$0xff]
    %v511 = vld [vmem:[%s508 + $0x10] sm:$0xff]
    %v512 = vld [vmem:[%s508 + $0x18] sm:$0xff]
    %v513 = vld [vmem:[%s508 + $0x20] sm:$0xff]
    %v514 = vld [vmem:[%s508 + $0x28] sm:$0xff]
    %v515 = vld [vmem:[%s508 + $0x30] sm:$0xff]
    %v516 = vld [vmem:[%s508 + $0x38] sm:$0xff]
    %v517 = vld [vmem:[%s508 + $0x40] sm:$0xff]
    %v518 = vld [vmem:[%s508 + $0x48] sm:$0xff]
    %v519 = vld [vmem:[%s508 + $0x50] sm:$0xff]
    %v520 = vld [vmem:[%s508 + $0x58] sm:$0xff]
    %v521 = vld [vmem:[%s508 + $0x60] sm:$0xff]
    %v522 = vld [vmem:[%s508 + $0x68] sm:$0xff]
    %v523 = vld [vmem:[%s508 + $0x70] sm:$0xff]
    %v524 = vld [vmem:[%s508 + $0x78] sm:$0xff]
    %v525 = vld [vmem:[%s3 + $0x4] sm:$0x1]
    %v526 = vlaneseq
    %v527 = vshrl.u32 %v526, 7
    %v528 = vsub.s32 0, %v527
    %v529 = vrot.slane %v525, %v528
    %530 = vmatprep.subr.mxu0 0.0
    %531 = vmatpush1.msra.mxu0 %v509
    %532 = vmatprep.subr.mxu0 0.0
    %533 = vmatpush1.msra.mxu0 %v510
    %534 = vmatprep.subr.mxu0 0.0
    %535 = vmatpush1.msra.mxu0 %v511
    %536 = vmatprep.subr.mxu0 0.0
    %537 = vmatpush1.msra.mxu0 %v512
    %538 = vmatprep.subr.mxu0 0.0
    %539 = vmatpush1.msra.mxu0 %v513
    %540 = vmatprep.subr.mxu0 0.0
    %541 = vmatpush1.msra.mxu0 %v514
    %542 = vmatprep.subr.mxu0 0.0
    %543 = vmatpush1.msra.mxu0 %v515
    %544 = vmatprep.subr.mxu0 0.0
    %545 = vmatpush1.msra.mxu0 %v516
    %546 = vmatprep.subr.mxu0 0.0
    %547 = vmatpush1.msra.mxu0 %v517
    %548 = vmatprep.subr.mxu0 0.0
    %549 = vmatpush1.msra.mxu0 %v518
    %550 = vmatprep.subr.mxu0 0.0
    %551 = vmatpush1.msra.mxu0 %v519
    %552 = vmatprep.subr.mxu0 0.0
    %553 = vmatpush1.msra.mxu0 %v520
    %554 = vmatprep.subr.mxu0 0.0
    %555 = vmatpush1.msra.mxu0 %v521
    %556 = vmatprep.subr.mxu0 0.0
    %557 = vmatpush1.msra.mxu0 %v522
    %558 = vmatprep.subr.mxu0 0.0
    %559 = vmatpush1.msra.mxu0 %v523
    %560 = vmatprep.subr.mxu0 0.0
    %561 = vmatpush1.msra.mxu0 %v524
    %562 = vmatprep.subr.mxu0 0.0
    %563 = vmatpush1.msra.mxu0 0.0
    %564 = vmatprep.subr.mxu0 0.0
    %565 = vmatpush1.msra.mxu0 0.0
    %566 = vmatprep.subr.mxu0 0.0
    %567 = vmatpush1.msra.mxu0 0.0
    %568 = vmatprep.subr.mxu0 0.0
    %569 = vmatpush1.msra.mxu0 0.0
    %570 = vmatprep.subr.mxu0 0.0
    %571 = vmatpush1.msra.mxu0 0.0
    %572 = vmatprep.subr.mxu0 0.0
    %573 = vmatpush1.msra.mxu0 0.0
    %574 = vmatprep.subr.mxu0 0.0
    %575 = vmatpush1.msra.mxu0 0.0
    %576 = vmatprep.subr.mxu0 0.0
    %577 = vmatpush1.msra.mxu0 0.0
    %578 = vmatprep.subr.mxu0 0.0
    %579 = vmatpush1.msra.mxu0 0.0
    %580 = vmatprep.subr.mxu0 0.0
    %581 = vmatpush1.msra.mxu0 0.0
    %582 = vmatprep.subr.mxu0 0.0
    %583 = vmatpush1.msra.mxu0 0.0
    %584 = vmatprep.subr.mxu0 0.0
    %585 = vmatpush1.msra.mxu0 0.0
    %586 = vmatprep.subr.mxu0 0.0
    %587 = vmatpush1.msra.mxu0 0.0
    %588 = vmatprep.subr.mxu0 0.0
    %589 = vmatpush1.msra.mxu0 0.0
    %590 = vmatprep.subr.mxu0 0.0
    %591 = vmatpush1.msra.mxu0 0.0
    %592 = vmatprep.subr.mxu0 0.0
    %593 = vmatpush1.msra.mxu0 0.0
    %594 = vmatprep.mubr.f32.mxu0 0.0
    %595 = vmatmul.mubr.f32.gmra.mrb[0].mxu0 %v507
    %v596 = vpop.f32.mrb[0].mxu0
    %v597 = vadd.f32 %v529, %v596
    %v598 = vpop.f32.mrb[0].mxu0
    %599 = vdwg.mxu0
    %v600 = vmax.f32 %v597, 0.0
    %v601 = vsel %vm505, %v600, %v597
    %s602 = scalar_lea.vmem [#allocation3], 640
    %v603 = vld [vmem:[%s602] sm:$0xff]
    %v604 = vld [vmem:[%s602 + $0x8] sm:$0xff]
    %v605 = vld [vmem:[%s602 + $0x10] sm:$0xff]
    %v606 = vld [vmem:[%s602 + $0x18] sm:$0xff]
    %v607 = vld [vmem:[%s602 + $0x20] sm:$0xff]
    %v608 = vld [vmem:[%s602 + $0x28] sm:$0xff]
    %v609 = vld [vmem:[%s602 + $0x30] sm:$0xff]
    %v610 = vld [vmem:[%s602 + $0x38] sm:$0xff]
    %v611 = vld [vmem:[%s602 + $0x40] sm:$0xff]
    %v612 = vld [vmem:[%s602 + $0x48] sm:$0xff]
    %v613 = vld [vmem:[%s602 + $0x50] sm:$0xff]
    %v614 = vld [vmem:[%s602 + $0x58] sm:$0xff]
    %v615 = vld [vmem:[%s602 + $0x60] sm:$0xff]
    %v616 = vld [vmem:[%s602 + $0x68] sm:$0xff]
    %v617 = vld [vmem:[%s602 + $0x70] sm:$0xff]
    %v618 = vld [vmem:[%s602 + $0x78] sm:$0xff]
    %v619 = vld [vmem:[%s3 + $0x5] sm:$0x1]
    %v620 = vlaneseq
    %v621 = vshrl.u32 %v620, 7
    %v622 = vsub.s32 0, %v621
    %v623 = vrot.slane %v619, %v622
    %624 = vmatprep.subr.mxu0 0.0
    %625 = vmatpush1.msra.mxu0 %v603
    %626 = vmatprep.subr.mxu0 0.0
    %627 = vmatpush1.msra.mxu0 %v604
    %628 = vmatprep.subr.mxu0 0.0
    %629 = vmatpush1.msra.mxu0 %v605
    %630 = vmatprep.subr.mxu0 0.0
    %631 = vmatpush1.msra.mxu0 %v606
    %632 = vmatprep.subr.mxu0 0.0
    %633 = vmatpush1.msra.mxu0 %v607
    %634 = vmatprep.subr.mxu0 0.0
    %635 = vmatpush1.msra.mxu0 %v608
    %636 = vmatprep.subr.mxu0 0.0
    %637 = vmatpush1.msra.mxu0 %v609
    %638 = vmatprep.subr.mxu0 0.0
    %639 = vmatpush1.msra.mxu0 %v610
    %640 = vmatprep.subr.mxu0 0.0
    %641 = vmatpush1.msra.mxu0 %v611
    %642 = vmatprep.subr.mxu0 0.0
    %643 = vmatpush1.msra.mxu0 %v612
    %644 = vmatprep.subr.mxu0 0.0
    %645 = vmatpush1.msra.mxu0 %v613
    %646 = vmatprep.subr.mxu0 0.0
    %647 = vmatpush1.msra.mxu0 %v614
    %648 = vmatprep.subr.mxu0 0.0
    %649 = vmatpush1.msra.mxu0 %v615
    %650 = vmatprep.subr.mxu0 0.0
    %651 = vmatpush1.msra.mxu0 %v616
    %652 = vmatprep.subr.mxu0 0.0
    %653 = vmatpush1.msra.mxu0 %v617
    %654 = vmatprep.subr.mxu0 0.0
    %655 = vmatpush1.msra.mxu0 %v618
    %656 = vmatprep.subr.mxu0 0.0
    %657 = vmatpush1.msra.mxu0 0.0
    %658 = vmatprep.subr.mxu0 0.0
    %659 = vmatpush1.msra.mxu0 0.0
    %660 = vmatprep.subr.mxu0 0.0
    %661 = vmatpush1.msra.mxu0 0.0
    %662 = vmatprep.subr.mxu0 0.0
    %663 = vmatpush1.msra.mxu0 0.0
    %664 = vmatprep.subr.mxu0 0.0
    %665 = vmatpush1.msra.mxu0 0.0
    %666 = vmatprep.subr.mxu0 0.0
    %667 = vmatpush1.msra.mxu0 0.0
    %668 = vmatprep.subr.mxu0 0.0
    %669 = vmatpush1.msra.mxu0 0.0
    %670 = vmatprep.subr.mxu0 0.0
    %671 = vmatpush1.msra.mxu0 0.0
    %672 = vmatprep.subr.mxu0 0.0
    %673 = vmatpush1.msra.mxu0 0.0
    %674 = vmatprep.subr.mxu0 0.0
    %675 = vmatpush1.msra.mxu0 0.0
    %676 = vmatprep.subr.mxu0 0.0
    %677 = vmatpush1.msra.mxu0 0.0
    %678 = vmatprep.subr.mxu0 0.0
    %679 = vmatpush1.msra.mxu0 0.0
    %680 = vmatprep.subr.mxu0 0.0
    %681 = vmatpush1.msra.mxu0 0.0
    %682 = vmatprep.subr.mxu0 0.0
    %683 = vmatpush1.msra.mxu0 0.0
    %684 = vmatprep.subr.mxu0 0.0
    %685 = vmatpush1.msra.mxu0 0.0
    %686 = vmatprep.subr.mxu0 0.0
    %687 = vmatpush1.msra.mxu0 0.0
    %688 = vmatprep.mubr.f32.mxu0 0.0
    %689 = vmatmul.mubr.f32.gmra.mrb[0].mxu0 %v601
    %v690 = vpop.f32.mrb[0].mxu0
    %v691 = vadd.f32 %v623, %v690
    %v692 = vpop.f32.mrb[0].mxu0
    %693 = vdwg.mxu0
    %v694 = vmax.f32 %v691, 0.0
    %vm695 = vcmp.ge.s32.totalorder %v41, 64
    %vm696 = vcmp.lt.s32.totalorder %v41, 96
    %vm697 = vmand %vm695, %vm696
    %v698 = vsel %vm697, %v597, -inf
    %699 = vmax.xlane.f32.xlu0 %v698
    %v700 = vpop.xlane.xlu0 %699
    %v701 = vsub.f32 %v597, %v700
    %v702 = vmul.f32 %v701, 1.442695
    %v703 = vpow.pop %v702
    %v704 = vsel %vm697, %v703, 0.0
    %705 = vadd.xlane.f32.xlu0 %v704
    %v706 = vpop.xlane.xlu0 %705
    %v707 = vrcp.pop %v706
    %v708 = vmul.f32 %v704, %v707
    %vm709 = vcmp.ge.s32.totalorder %v41, 32
    %vm710 = vcmp.lt.s32.totalorder %v41, 64
    %vm711 = vmand %vm709, %vm710
    %vm712 = vcmp.lt.s32.totalorder %v41, 16
    %v713 = vsel %vm712, %v137, 0.0
    %v714 = vadd.f32 %v713, %v694
    %v715 = vsel %vm711, %v597, 0.0
    %v716 = vadd.f32 %v714, %v715
    %v717 = vadd.f32 %v716, %v708
    %v718 = vadd.f32 %v717, %v323
    %719 = vst [vmem:[#allocation6] sm:$0xff] %v718
    // Predicated region
    $region30: #{tpu_custom_call.1} parent=1 // pred_check
      _
    $region31: #{tpu_custom_call.1} parent=1 // pred_check_branch
      %721 = sbr.rel (0) target = $region33
    $region32: #{tpu_custom_call.1} parent=1 // pred_region
      %s723 = ssub.s32 128, 128
      %724 = vsyncadd [#allocation5], %s723
      %s726 = sshll.u32 [#allocation6], 4
      %s727 = int_to_ptr.vmem [resolvable:$true] %s726
      %729 = dma.vmem_to_hbm [thread:$0]  %s727, 128, %s6, [#allocation5]
    $region33: #{tpu_custom_call.1} parent=1 // pred_fallthru
      _
    // Predicated region
    $region34: #{tpu_custom_call.1} parent=1 // pred_check
      _
    $region35: #{tpu_custom_call.1} parent=1 // pred_check_branch
      %731 = sbr.rel (0) target = $region37
    $region36: #{tpu_custom_call.1} parent=1 // pred_region
      %732 = dma.done [#allocation5], 128
    $region37: #{tpu_custom_call.1} parent=1 // pred_fallthru
      _
    %733 = vsyncpa [#allocation4], 1
    %734 = vsyncpa [#allocation5], 1

</llo_original>
